<compile_context>
chip_gen: v6e
topology: v6e:2x2x1
jax: 0.10.0
libtpu: 0.0.40
codegen_flags: <defaults>
</compile_context>

<pallas_src>
import numpy as np

import jax
import jax.numpy as jnp
from jax.experimental import pallas as pl

F32 = jnp.float32
BF16 = jnp.bfloat16
BN_EPS = 1e-5

STRIDE = 16
PAD = 32


# ----------------------------------------------------------------------------
# Pallas kernel: single launch, no grid — all refs are whole arrays in VMEM.
# Two MXU matmuls (conv-as-im2col, then fused [identity | pool2+interp |
# pool3+interp] map), one lane-dense store.
# ----------------------------------------------------------------------------
def _main1_kernel(w_ref, p_ref, m_ref, o_ref):
    # w_ref : (Cout, Cin*K+1)    bf16  BN-folded conv weight | folded-bias column
    # p_ref : (Cin*K+1, B*Lout)  bf16  im2col patches        | all-ones bias row
    # m_ref : (B*Lout, 128)      bf16  [ I | avg2+interp | avg3+interp | 0-pad ]
    # o_ref : (Cout, 128)        f32   [ x1 | x2 | x3 | 0-pad ]  lane-dense slab
    y = jnp.dot(w_ref[...], p_ref[...], preferred_element_type=jnp.float32)
    y = jnp.maximum(y, 0.0)                     # conv + folded BN + ReLU (f32, VPU)
    o_ref[...] = jnp.dot(y.astype(BF16), m_ref[...],
                         preferred_element_type=jnp.float32)


# ----------------------------------------------------------------------------
# Trace-time constant builders (pure numpy).
# ----------------------------------------------------------------------------
def _pool_interp_matrix(L, k):
    """(L, L) matrix M such that  y @ M == interpolate(avgpool_k(y), size=L)
    along the last axis (AvgPool1d(k, k) + mode='linear', align_corners=False)."""
    Lp = L // k
    P = np.zeros((L, Lp), np.float32)                  # avgpool (stride == kernel)
    for p in range(Lp):
        P[p * k:(p + 1) * k, p] = 1.0 / k
    I = np.zeros((Lp, L), np.float32)                  # linear interp back to L
    scale = Lp / L
    for j in range(L):
        src = max((j + 0.5) * scale - 0.5, 0.0)
        i0 = min(int(np.floor(src)), Lp - 1)
        i1 = min(i0 + 1, Lp - 1)
        w = src - i0
        I[i0, j] += 1.0 - w
        I[i1, j] += w
    return P @ I


def _fused_output_map(B, Lout, lanes):
    """(B*Lout, lanes) constant combining identity (x1), avgpool2+interp (x2)
    and avgpool3+interp (x3) — each block-diagonal over batch — zero-padded to
    `lanes` columns so the kernel's single store is a full-128-lane slab."""
    maps = (np.eye(Lout, dtype=np.float32),
            _pool_interp_matrix(Lout, 2),
            _pool_interp_matrix(Lout, 3))
    BL = B * Lout
    M = np.zeros((BL, lanes), np.float32)
    for seg, Mk in enumerate(maps):
        for b in range(B):
            M[b * Lout:(b + 1) * Lout,
              seg * BL + b * Lout: seg * BL + (b + 1) * Lout] = Mk
    # TODO(synk): block-diagonal is O(B^2 * Lout^2); for large batch switch to
    # per-batch (Lout, Lout) maps + a batch grid axis with
    # dimension_semantics=("parallel",) (shards across v7x's 2 TensorCores) and
    # set pltpu.CompilerParams(vmem_limit_bytes=...) explicitly. At B=2 the
    # whole constant is ~9 KiB so the gridless single launch is optimal.
    return M


# ----------------------------------------------------------------------------
# Forward
# ----------------------------------------------------------------------------
def main1_forward(params, x):
    # TODO(synk): nn.Dropout(0.3) is treated as eval-mode identity (no RNG).
    w, b = params["conv_w"], params["conv_b"]
    Cout, Cin, K = w.shape
    B, _, L = x.shape
    Lout = (L + 2 * PAD - K) // STRIDE + 1
    BL = B * Lout
    lanes = max(128, ((3 * BL + 127) // 128) * 128)    # pad to a full lane tile

    # Fold eval-mode BatchNorm1d into the conv weight/bias, then fold the bias
    # into the contraction (extra weight column + all-ones patches row).
    s = params["bn_gamma"] / jnp.sqrt(params["bn_var"] + BN_EPS)
    w2d = (w * s[:, None, None]).reshape(Cout, Cin * K)
    bcol = (s * (b - params["bn_mean"]) + params["bn_beta"]).reshape(Cout, 1)
    w_aug = jnp.concatenate([w2d, bcol], axis=1).astype(BF16)      # (Cout, Cin*K+1)

    # im2col via one fused XLA op (Cin == 1 => patch-feature index == kernel tap).
    patches = jax.lax.conv_general_dilated_patches(
        x, filter_shape=(K,), window_strides=(STRIDE,), padding=[(PAD, PAD)],
        dimension_numbers=("NCH", "OIH", "NCH"))                   # (B, Cin*K, Lout)
    patches = patches.transpose(1, 0, 2).reshape(Cin * K, BL)      # batch -> lanes
    p_aug = jnp.concatenate([patches, jnp.ones((1, BL), patches.dtype)], axis=0)
    p_aug = p_aug.astype(BF16)                                     # (Cin*K+1, B*Lout)

    m_cat = jnp.asarray(_fused_output_map(B, Lout, lanes), dtype=BF16)

    out_slab = pl.pallas_call(
        _main1_kernel,
        out_shape=jax.ShapeDtypeStruct((Cout, lanes), F32),
    )(w_aug, p_aug, m_cat)

    # Lane-dense (Cout, 3*B*Lout) slab -> (B, 3*Cout, Lout) NCL with channel
    # order [x1 | x2 | x3], exactly like torch.cat(..., dim=1).
    out = out_slab[:, :3 * BL].reshape(Cout, 3, B, Lout)
    return out.transpose(2, 1, 0, 3).reshape(B, 3 * Cout, Lout)


# ----------------------------------------------------------------------------
# Pure-JAX reference (independent code path) for correctness checking
# ----------------------------------------------------------------------------
def main1_reference(params, x):
    w, b = params["conv_w"], params["conv_b"]
    y = jax.lax.conv_general_dilated(
        x, w, window_strides=(STRIDE,), padding=[(PAD, PAD)],
        dimension_numbers=("NCH", "OIH", "NCH"),
        precision=jax.lax.Precision.HIGHEST)
    y = y + b[None, :, None]
    s = params["bn_gamma"] / jnp.sqrt(params["bn_var"] + BN_EPS)
    y = s[None, :, None] * (y - params["bn_mean"][None, :, None]) \
        + params["bn_beta"][None, :, None]
    y = jnp.maximum(y, 0.0)
    L = y.shape[-1]

    def pool(v, k):
        Lp = L // k
        return v[:, :, :Lp * k].reshape(v.shape[0], v.shape[1], Lp, k).mean(-1)

    def interp(v, size):
        Lin = v.shape[-1]
        scale = Lin / size
        j = jnp.arange(size, dtype=F32)
        src = jnp.maximum((j + 0.5) * scale - 0.5, 0.0)
        i0 = jnp.minimum(jnp.floor(src).astype(jnp.int32), Lin - 1)
        i1 = jnp.minimum(i0 + 1, Lin - 1)
        wgt = src - i0.astype(F32)
        return v[:, :, i0] * (1.0 - wgt) + v[:, :, i1] * wgt

    y2 = interp(pool(y, 2), L)
    y3 = interp(pool(y, 3), L)
    return jnp.concatenate([y, y2, y3], axis=1)


# ----------------------------------------------------------------------------
if __name__ == "__main__":
    key = jax.random.PRNGKey(0)
    kw, kb, kx = jax.random.split(key, 3)

    Cout, Cin, K = 10, 1, 33
    params = {
        "conv_w": (0.1 * jax.random.normal(kw, (Cout, Cin, K))).astype(F32),
        "conv_b": (0.01 * jax.random.normal(kb, (Cout,))).astype(F32),
        # PyTorch-default eval BatchNorm stats (the fold is general, so trained
        # gamma/beta/mean/var would also be handled correctly).
        "bn_gamma": jnp.ones((Cout,), F32),
        "bn_beta": jnp.zeros((Cout,), F32),
        "bn_mean": jnp.zeros((Cout,), F32),
        "bn_var": jnp.ones((Cout,), F32),
    }

    B, L = 2, 256
    x = jax.random.normal(kx, (B, Cin, L), dtype=F32)

    fwd = jax.jit(main1_forward)
    out = fwd(params, x)
    jax.block_until_ready(out)

    Lout = (L + 2 * PAD - K) // STRIDE + 1
    assert out.shape == (B, 3 * Cout, Lout), out.shape
    assert bool(jnp.all(jnp.isfinite(out)))

    ref = main1_reference(params, x)
    max_err = float(jnp.max(jnp.abs(out - ref)))
    # bf16 MXU operands with f32 accumulation: expected max abs err ~1e-2 at
    # these magnitudes; structural bugs show up as O(0.1+), so this still
    # catches any real mistake.
    assert max_err < 2.5e-2, f"max abs err vs reference: {max_err}"

    print("KERNEL_OK")
</pallas_src>

<mosaic_0001>
module attributes {stable_mosaic.version = 11 : i64} {
  func.func @_main1_kernel(%arg0: memref<10x34xbf16, #tpu.memory_space<vmem>>, %arg1: memref<34x36xbf16, #tpu.memory_space<vmem>>, %arg2: memref<36x128xbf16, #tpu.memory_space<vmem>>, %arg3: memref<10x128xf32, #tpu.memory_space<vmem>>) attributes {dimension_semantics = [], scalar_prefetch = 0 : i64, scratch_operands = 0 : i64, tpu.core_type = #tpu.core_type<tc>} {
    %c0 = arith.constant 0 : index
    %c0_0 = arith.constant 0 : index
    %0 = vector.load %arg0[%c0, %c0_0] : memref<10x34xbf16, #tpu.memory_space<vmem>>, vector<10x34xbf16>
    %c0_1 = arith.constant 0 : index
    %c0_2 = arith.constant 0 : index
    %1 = vector.load %arg1[%c0_1, %c0_2] : memref<34x36xbf16, #tpu.memory_space<vmem>>, vector<34x36xbf16>
    %cst = arith.constant dense<0.000000e+00> : vector<10x36xf32>
    %2 = tpu.matmul %0, %1, %cst {dimension_numbers = #tpu.dot_dimension_numbers<[1], [0], [0], [1], [0, 0, 1, 1], [], []>} : vector<10x34xbf16>, vector<34x36xbf16>, vector<10x36xf32> -> vector<10x36xf32>
    %cst_3 = arith.constant 0.000000e+00 : f32
    %3 = vector.broadcast %cst_3 : f32 to vector<10x36xf32>
    %4 = arith.maximumf %2, %3 : vector<10x36xf32>
    %5 = arith.truncf %4 : vector<10x36xf32> to vector<10x36xbf16>
    %c0_4 = arith.constant 0 : index
    %c0_5 = arith.constant 0 : index
    %6 = vector.load %arg2[%c0_4, %c0_5] : memref<36x128xbf16, #tpu.memory_space<vmem>>, vector<36x128xbf16>
    %cst_6 = arith.constant dense<0.000000e+00> : vector<10x128xf32>
    %7 = tpu.matmul %5, %6, %cst_6 {dimension_numbers = #tpu.dot_dimension_numbers<[1], [0], [0], [1], [0, 0, 1, 1], [], []>} : vector<10x36xbf16>, vector<36x128xbf16>, vector<10x128xf32> -> vector<10x128xf32>
    %c0_7 = arith.constant 0 : index
    %c0_8 = arith.constant 0 : index
    %8 = vector.load %arg3[%c0_7, %c0_8] : memref<10x128xf32, #tpu.memory_space<vmem>>, vector<10x128xf32>
    tpu.vector_store %arg3[%c0_7, %c0_8], %7 {strides = array<i32>} : memref<10x128xf32, #tpu.memory_space<vmem>>, vector<10x128xf32>,
    return
  }
}

</mosaic_0001>

<llo_original>
// kernel: main1_forward.1
$region0: #{main1_forward.1}
  #allocation0 [shape = 'u32[]', space=smem, size = 0x4, offset = 0x4, fixed_abs, tag = 'smem constant byte address 0x4 - core index']
  #allocation1 [shape = 'u32[144,128]{1,0:T(1,128)}', space=vmem, size = 0x12000, scoped, tag = 'internal scratch']
  %s0 = inlined_call_operand.vmem [shape: bf16[10,34], index: 0, kind: input, shape index: {}]
  %s1 = inlined_call_operand.vmem [shape: bf16[34,36], index: 1, kind: input, shape index: {}]
  %s2 = inlined_call_operand.vmem [shape: bf16[36,128], index: 2, kind: input, shape index: {}]
  %s3 = inlined_call_operand.vmem [shape: f32[10,128], index: 3, kind: output, shape index: {}]
  %s4 = sld [smem:[#allocation0]]
  $region22: #{main1_forward.1} parent=0
    _
  %s6 = ssub.s32 1, %s4
  %s7 = scalar_select 0, %s6, %s4
  // Predicated region
  $region2: #{main1_forward.1} parent=0 // pred_check
    _
  $region3: #{main1_forward.1} parent=0 // pred_check_branch
    %9 = sbr.rel (0) target = $region5
  $region4: #{main1_forward.1} parent=0 // pred_region
    _
  $region5: #{main1_forward.1} parent=0 // pred_fallthru
    _
  // Predicated region
  $region6: #{main1_forward.1} parent=0 // pred_check
    _
  $region7: #{main1_forward.1} parent=0 // pred_check_branch
    %11 = sbr.rel (0) target = $region9
  $region8: #{main1_forward.1} parent=0 // pred_region
    _
  $region9: #{main1_forward.1} parent=0 // pred_fallthru
    _
  // Predicated region
  $region10: #{main1_forward.1} parent=0 // pred_check
    _
  $region11: #{main1_forward.1} parent=0 // pred_check_branch
    %13 = sbr.rel (0) target = $region13
  $region12: #{main1_forward.1} parent=0 // pred_region
    _
  $region13: #{main1_forward.1} parent=0 // pred_fallthru
    _
  %v15 = vld [vmem:[%s0] sm:$0xf]
  %v16 = vld [vmem:[%s0 + $0x4] sm:$0x1]
  %v17 = vld [vmem:[%s1] sm:$0xf]
  %v18 = vld [vmem:[%s1 + $0x4] sm:$0xf]
  %v19 = vld [vmem:[%s1 + $0x8] sm:$0xf]
  %v20 = vld [vmem:[%s1 + $0xc] sm:$0xf]
  %v21 = vld [vmem:[%s1 + $0x10] sm:$0x1]
  %v24 = vunpack.c.l.b16 %v15
  %v25 = vunpack.c.l.b16 %v16
  %v26 = vpack.c.b16 %v25, %v24
  %v32 = vunpack.c.l.b16 %v17
  %v33 = vunpack.c.l.b16 %v18
  %v34 = vunpack.c.l.b16 %v19
  %v35 = vunpack.c.l.b16 %v20
  %v36 = vunpack.c.l.b16 %v21
  %v37 = vpack.c.b16 %v33, %v32
  %v38 = vpack.c.b16 %v35, %v34
  %v39 = vpack.c.b16 %v36, %v36
  %vm42 = vcmask 277504
  %v44 = vsel %vm42, %v26, 0
  %vm46 = vcmask 1040384
  %v48 = vsel %vm46, %v39, 0
  %50 = vmatprep.subr.bf16.mxu0 0
  %51 = vmatpush1.bf16.msra.mxu0 0
  %52 = vmatprep.subr.bf16.mxu0 0
  %53 = vmatpush1.bf16.msra.mxu0 0
  %54 = vmatprep.subr.bf16.mxu0 0
  %55 = vmatpush1.bf16.msra.mxu0 0
  %56 = vmatprep.subr.bf16.mxu0 0
  %57 = vmatpush1.bf16.msra.mxu0 0
  %58 = vmatprep.subr.bf16.mxu0 0
  %59 = vmatpush1.bf16.msra.mxu0 0
  %60 = vmatprep.subr.bf16.mxu0 0
  %61 = vmatpush1.bf16.msra.mxu0 %v48
  %62 = vmatprep.subr.bf16.mxu0 0
  %63 = vmatpush1.bf16.msra.mxu0 %v38
  %64 = vmatprep.subr.bf16.mxu0 0
  %65 = vmatpush1.bf16.msra.mxu0 %v37
  %66 = vmatprep.subr.bf16.mxu0 0
  %67 = vmatpush2.bf16.msra.mxu0 0
  %68 = vmatprep.subr.bf16.mxu0 0
  %69 = vmatpush2.bf16.msra.mxu0 0
  %70 = vmatprep.subr.bf16.mxu0 0
  %71 = vmatpush2.bf16.msra.mxu0 0
  %72 = vmatprep.subr.bf16.mxu0 0
  %73 = vmatpush2.bf16.msra.mxu0 0
  %74 = vmatprep.subr.bf16.mxu0 0
  %75 = vmatpush2.bf16.msra.mxu0 0
  %76 = vmatprep.subr.bf16.mxu0 0
  %77 = vmatpush2.bf16.msra.mxu0 0
  %78 = vmatprep.subr.bf16.mxu0 0
  %79 = vmatpush2.bf16.msra.mxu0 0
  %80 = vmatprep.subr.bf16.mxu0 0
  %81 = vmatpush2.bf16.msra.mxu0 0
  %82 = vmatprep.mubr.bf16.mxu0 0
  %83 = vmatmul.mubr.bf16.gmra.mxu0 %v44
  %v84 = vpop.f32.mrf.mxu0
  %v85 = vadd.f32 0.0, %v84
  %v86 = vpop.f32.mrf.mxu0
  %v87 = vpop.f32.mrf.mxu0
  %v88 = vadd.f32 0.0, %v87
  %v89 = vpop.f32.mrf.mxu0
  %90 = vdwg.mxu0
  %v91 = vmax.f32 %v85, 0.0
  %v92 = vmax.f32 %v88, 0.0
  %v93 = vpack.c.bf16 %v92, %v91
  %v94 = vld [vmem:[%s2] sm:$0xf]
  %v95 = vld [vmem:[%s2 + $0x4] sm:$0xf]
  %v96 = vld [vmem:[%s2 + $0x8] sm:$0xf]
  %v97 = vld [vmem:[%s2 + $0xc] sm:$0xf]
  %v98 = vld [vmem:[%s2 + $0x10] sm:$0x3]
  %v104 = vunpack.c.l.b16 %v94
  %v105 = vunpack.c.l.b16 %v95
  %v106 = vunpack.c.l.b16 %v96
  %v107 = vunpack.c.l.b16 %v97
  %v108 = vunpack.c.l.b16 %v98
  %v109 = vpack.c.b16 %v105, %v104
  %v110 = vpack.c.b16 %v107, %v106
  %v111 = vpack.c.b16 %v108, %v108
  %vm114 = vcmask 293888
  %v116 = vsel %vm114, %v93, 0
  %vm118 = vcmask 1041408
  %v120 = vsel %vm118, %v111, 0
  %122 = vmatprep.subr.bf16.mxu0 0
  %123 = vmatpush1.bf16.msra.mxu0 0
  %124 = vmatprep.subr.bf16.mxu0 0
  %125 = vmatpush1.bf16.msra.mxu0 0
  %126 = vmatprep.subr.bf16.mxu0 0
  %127 = vmatpush1.bf16.msra.mxu0 0
  %128 = vmatprep.subr.bf16.mxu0 0
  %129 = vmatpush1.bf16.msra.mxu0 0
  %130 = vmatprep.subr.bf16.mxu0 0
  %131 = vmatpush1.bf16.msra.mxu0 0
  %132 = vmatprep.subr.bf16.mxu0 0
  %133 = vmatpush1.bf16.msra.mxu0 %v120
  %134 = vmatprep.subr.bf16.mxu0 0
  %135 = vmatpush1.bf16.msra.mxu0 %v110
  %136 = vmatprep.subr.bf16.mxu0 0
  %137 = vmatpush1.bf16.msra.mxu0 %v109
  %138 = vmatprep.subr.bf16.mxu0 0
  %139 = vmatpush2.bf16.msra.mxu0 0
  %140 = vmatprep.subr.bf16.mxu0 0
  %141 = vmatpush2.bf16.msra.mxu0 0
  %142 = vmatprep.subr.bf16.mxu0 0
  %143 = vmatpush2.bf16.msra.mxu0 0
  %144 = vmatprep.subr.bf16.mxu0 0
  %145 = vmatpush2.bf16.msra.mxu0 0
  %146 = vmatprep.subr.bf16.mxu0 0
  %147 = vmatpush2.bf16.msra.mxu0 0
  %148 = vmatprep.subr.bf16.mxu0 0
  %149 = vmatpush2.bf16.msra.mxu0 0
  %150 = vmatprep.subr.bf16.mxu0 0
  %151 = vmatpush2.bf16.msra.mxu0 0
  %152 = vmatprep.subr.bf16.mxu0 0
  %153 = vmatpush2.bf16.msra.mxu0 0
  %154 = vmatprep.mubr.bf16.mxu0 0
  %155 = vmatmul.mubr.bf16.gmra.mxu0 %v116
  %v156 = vpop.f32.mrf.mxu0
  %v157 = vadd.f32 0.0, %v156
  %v158 = vpop.f32.mrf.mxu0
  %v159 = vpop.f32.mrf.mxu0
  %v160 = vadd.f32 0.0, %v159
  %v161 = vpop.f32.mrf.mxu0
  %162 = vdwg.mxu0
  %163 = vst [vmem:[%s3] sm:$0xff] %v157
  %164 = vst [vmem:[%s3 + $0x8] sm:$0x3] %v160
  // Predicated region
  $region14: #{main1_forward.1} parent=0 // pred_check
    _
  $region15: #{main1_forward.1} parent=0 // pred_check_branch
    %166 = sbr.rel (0) target = $region17
  $region16: #{main1_forward.1} parent=0 // pred_region
    _
  $region17: #{main1_forward.1} parent=0 // pred_fallthru
    _
  // Predicated region
  $region18: #{main1_forward.1} parent=0 // pred_check
    _
  $region19: #{main1_forward.1} parent=0 // pred_check_branch
    %168 = sbr.rel (0) target = $region21
  $region20: #{main1_forward.1} parent=0 // pred_region
    _
  $region21: #{main1_forward.1} parent=0 // pred_fallthru
    _

</llo_original>
